<compile_context>
chip_gen: v7x
topology: tpu7x:2x2x1
jax: 0.10.0
libtpu: 0.0.40
codegen_flags: <defaults>
</compile_context>

<pallas_src>
import jax
import jax.numpy as jnp
from jax.experimental import pallas as pl
from jax.experimental.pallas import tpu as pltpu

K = 3            # kernel size
C_IN = 3
C_OUT = 10
PAD = 1


def conv1d_kernel(x_ref, w_ref, b_ref, o_ref, xpad_ref):
    # x_ref   : (C_IN, L)        one batch element (NCL: channels on sublanes, L on lanes)
    # w_ref   : (C_OUT, C_IN*K)  weights, reshaped so column (ci*K + k) == weight[:, ci, k]
    # b_ref   : (C_OUT, 1)       bias column
    # o_ref   : (C_OUT, L)       output for this batch element (lane-dense in L)
    # xpad_ref: (C_IN, L + 2)    VMEM scratch holding the zero-padded input row
    L = x_ref.shape[-1]

    # Build the zero-padded input once in VMEM; taps become static lane slices.
    xpad_ref[...] = jnp.zeros_like(xpad_ref)
    xpad_ref[:, PAD:PAD + L] = x_ref[...]

    acc = jnp.zeros((C_OUT, L), dtype=jnp.float32)
    # 9 rank-1 VPU FMAs: (C_OUT, 1) weight column * (1, L) shifted input row.
    for k in range(K):
        xk = xpad_ref[:, k:k + L]                       # (C_IN, L): x_pad[:, l + k]
        for ci in range(C_IN):
            col = ci * K + k
            acc = acc + w_ref[:, col:col + 1] * xk[ci:ci + 1, :]

    o_ref[...] = (acc + b_ref[...]).astype(o_ref.dtype)


def conv1d_pallas(x_ncl, weight, bias):
    """x_ncl: (N, C_IN, L) f32; weight: (C_OUT, C_IN, K); bias: (C_OUT,).

    Returns (N, C_OUT, L) — same NCL convention as the PyTorch module.
    """
    N, C, L = x_ncl.shape
    assert C == C_IN

    w2d = weight.reshape(C_OUT, C_IN * K)   # row-major: column index = ci*K + k
    b2d = bias.reshape(C_OUT, 1)

    # TODO(synk): for very long L, additionally tile L in multiple-of-128 blocks
    # with a 1-element halo instead of loading the full row per grid step.
    return pl.pallas_call(
        conv1d_kernel,
        out_shape=jax.ShapeDtypeStruct((N, C_OUT, L), x_ncl.dtype),
        grid_spec=pltpu.PrefetchScalarGridSpec(
            num_scalar_prefetch=0,
            grid=(N,),
            in_specs=[
                pl.BlockSpec((None, C_IN, L), lambda n: (n, 0, 0)),      # x, batch squeezed
                pl.BlockSpec((C_OUT, C_IN * K), lambda n: (0, 0)),       # weights (resident)
                pl.BlockSpec((C_OUT, 1), lambda n: (0, 0)),              # bias column
            ],
            out_specs=pl.BlockSpec((None, C_OUT, L), lambda n: (n, 0, 0)),
            scratch_shapes=[pltpu.VMEM((C_IN, L + 2 * PAD), jnp.float32)],
        ),
        compiler_params=pltpu.CompilerParams(
            dimension_semantics=("parallel",),
        ),
    )(x_ncl, w2d, b2d)


def conv1d_reference(x_ncl, weight, bias):
    """Pure-JAX reference (lax conv) for a sanity check."""
    out = jax.lax.conv_general_dilated(
        x_ncl, weight,
        window_strides=(1,), padding=((PAD, PAD),),
        dimension_numbers=("NCH", "OIH", "NCH"),
    )
    return out + bias[None, :, None]


if __name__ == "__main__":
    key = jax.random.PRNGKey(0)
    kx, kw, kb = jax.random.split(key, 3)

    # Small, deterministic shapes consistent with Conv1d(3, 10, k=3, pad=1).
    N, L = 2, 16
    x = jax.random.normal(kx, (N, C_IN, L), dtype=jnp.float32)

    # Deterministic parameter init (synthetic; mirrors Conv1d uniform fan-in scale).
    fan_in = C_IN * K
    bound = 1.0 / jnp.sqrt(fan_in)
    weight = jax.random.uniform(kw, (C_OUT, C_IN, K), jnp.float32, -bound, bound)
    bias = jax.random.uniform(kb, (C_OUT,), jnp.float32, -bound, bound)

    out = conv1d_pallas(x, weight, bias)
    out = jax.block_until_ready(out)

    ref = conv1d_reference(x, weight, bias)
    assert out.shape == (N, C_OUT, L)
    assert jnp.allclose(out, ref, atol=1e-5, rtol=1e-5)

    print("KERNEL_OK")
</pallas_src>

<mosaic_0001>
module attributes {stable_mosaic.version = 11 : i64} {
  func.func @conv1d_kernel(%arg0: i32, %arg1: memref<1x3x16xf32, #tpu.memory_space<vmem>>, %arg2: memref<10x9xf32, #tpu.memory_space<vmem>>, %arg3: memref<10x1xf32, #tpu.memory_space<vmem>>, %arg4: memref<1x10x16xf32, #tpu.memory_space<vmem>>, %arg5: memref<3x18xf32, #tpu.memory_space<vmem>>) attributes {dimension_semantics = [#tpu.dimension_semantics<parallel>], iteration_bounds = array<i64: 2>, scalar_prefetch = 0 : i64, scratch_operands = 1 : i64, tpu.core_type = #tpu.core_type<tc>, window_params = [{transform_indices = @transform_0, window_bounds = array<i64: 1, 3, 16>}, {pipeline_mode = #tpu.pipeline_mode<synchronous>, transform_indices = @transform_1, window_bounds = array<i64: 10, 9>}, {pipeline_mode = #tpu.pipeline_mode<synchronous>, transform_indices = @transform_2, window_bounds = array<i64: 10, 1>}, {transform_indices = @transform_3, window_bounds = array<i64: 1, 10, 16>}]} {
    %cst = arith.constant 0.000000e+00 : f32
    %0 = vector.broadcast %cst : f32 to vector<3x18xf32>
    %c0 = arith.constant 0 : index
    %c0_0 = arith.constant 0 : index
    %1 = vector.load %arg5[%c0, %c0_0] : memref<3x18xf32, #tpu.memory_space<vmem>>, vector<3x18xf32>
    tpu.vector_store %arg5[%c0, %c0_0], %0 {strides = array<i32>} : memref<3x18xf32, #tpu.memory_space<vmem>>, vector<3x18xf32>,
    %c0_1 = arith.constant 0 : index
    %c0_2 = arith.constant 0 : index
    %c0_3 = arith.constant 0 : index
    %2 = vector.load %arg1[%c0_1, %c0_2, %c0_3] : memref<1x3x16xf32, #tpu.memory_space<vmem>>, vector<1x3x16xf32>
    %3 = vector.shape_cast %2 : vector<1x3x16xf32> to vector<3x16xf32>
    %c0_4 = arith.constant 0 : index
    %c1 = arith.constant 1 : index
    %4 = vector.load %arg5[%c0_4, %c1] : memref<3x18xf32, #tpu.memory_space<vmem>>, vector<3x16xf32>
    tpu.vector_store %arg5[%c0_4, %c1], %3 {strides = array<i32>} : memref<3x18xf32, #tpu.memory_space<vmem>>, vector<3x16xf32>,
    %cst_5 = arith.constant 0.000000e+00 : f32
    %5 = vector.broadcast %cst_5 : f32 to vector<10x16xf32>
    %c0_6 = arith.constant 0 : index
    %c0_7 = arith.constant 0 : index
    %6 = vector.load %arg5[%c0_6, %c0_7] : memref<3x18xf32, #tpu.memory_space<vmem>>, vector<3x16xf32>
    %c0_8 = arith.constant 0 : index
    %c0_9 = arith.constant 0 : index
    %7 = vector.load %arg2[%c0_8, %c0_9] : memref<10x9xf32, #tpu.memory_space<vmem>>, vector<10x1xf32>
    %8 = vector.extract_strided_slice %6 {offsets = [0, 0], sizes = [1, 16], strides = [1, 1]} : vector<3x16xf32> to vector<1x16xf32>
    %9 = vector.broadcast %7 : vector<10x1xf32> to vector<10x16xf32>
    %10 = vector.broadcast %8 : vector<1x16xf32> to vector<10x16xf32>
    %11 = arith.mulf %9, %10 : vector<10x16xf32>
    %12 = arith.addf %5, %11 : vector<10x16xf32>
    %c0_10 = arith.constant 0 : index
    %c3 = arith.constant 3 : index
    %13 = vector.load %arg2[%c0_10, %c3] : memref<10x9xf32, #tpu.memory_space<vmem>>, vector<10x1xf32>
    %14 = vector.extract_strided_slice %6 {offsets = [1, 0], sizes = [1, 16], strides = [1, 1]} : vector<3x16xf32> to vector<1x16xf32>
    %15 = vector.broadcast %13 : vector<10x1xf32> to vector<10x16xf32>
    %16 = vector.broadcast %14 : vector<1x16xf32> to vector<10x16xf32>
    %17 = arith.mulf %15, %16 : vector<10x16xf32>
    %18 = arith.addf %12, %17 : vector<10x16xf32>
    %c0_11 = arith.constant 0 : index
    %c6 = arith.constant 6 : index
    %19 = vector.load %arg2[%c0_11, %c6] : memref<10x9xf32, #tpu.memory_space<vmem>>, vector<10x1xf32>
    %20 = vector.extract_strided_slice %6 {offsets = [2, 0], sizes = [1, 16], strides = [1, 1]} : vector<3x16xf32> to vector<1x16xf32>
    %21 = vector.broadcast %19 : vector<10x1xf32> to vector<10x16xf32>
    %22 = vector.broadcast %20 : vector<1x16xf32> to vector<10x16xf32>
    %23 = arith.mulf %21, %22 : vector<10x16xf32>
    %24 = arith.addf %18, %23 : vector<10x16xf32>
    %c0_12 = arith.constant 0 : index
    %c1_13 = arith.constant 1 : index
    %25 = vector.load %arg5[%c0_12, %c1_13] : memref<3x18xf32, #tpu.memory_space<vmem>>, vector<3x16xf32>
    %c0_14 = arith.constant 0 : index
    %c1_15 = arith.constant 1 : index
    %26 = vector.load %arg2[%c0_14, %c1_15] : memref<10x9xf32, #tpu.memory_space<vmem>>, vector<10x1xf32>
    %27 = vector.extract_strided_slice %25 {offsets = [0, 0], sizes = [1, 16], strides = [1, 1]} : vector<3x16xf32> to vector<1x16xf32>
    %28 = vector.broadcast %26 : vector<10x1xf32> to vector<10x16xf32>
    %29 = vector.broadcast %27 : vector<1x16xf32> to vector<10x16xf32>
    %30 = arith.mulf %28, %29 : vector<10x16xf32>
    %31 = arith.addf %24, %30 : vector<10x16xf32>
    %c0_16 = arith.constant 0 : index
    %c4 = arith.constant 4 : index
    %32 = vector.load %arg2[%c0_16, %c4] : memref<10x9xf32, #tpu.memory_space<vmem>>, vector<10x1xf32>
    %33 = vector.extract_strided_slice %25 {offsets = [1, 0], sizes = [1, 16], strides = [1, 1]} : vector<3x16xf32> to vector<1x16xf32>
    %34 = vector.broadcast %32 : vector<10x1xf32> to vector<10x16xf32>
    %35 = vector.broadcast %33 : vector<1x16xf32> to vector<10x16xf32>
    %36 = arith.mulf %34, %35 : vector<10x16xf32>
    %37 = arith.addf %31, %36 : vector<10x16xf32>
    %c0_17 = arith.constant 0 : index
    %c7 = arith.constant 7 : index
    %38 = vector.load %arg2[%c0_17, %c7] : memref<10x9xf32, #tpu.memory_space<vmem>>, vector<10x1xf32>
    %39 = vector.extract_strided_slice %25 {offsets = [2, 0], sizes = [1, 16], strides = [1, 1]} : vector<3x16xf32> to vector<1x16xf32>
    %40 = vector.broadcast %38 : vector<10x1xf32> to vector<10x16xf32>
    %41 = vector.broadcast %39 : vector<1x16xf32> to vector<10x16xf32>
    %42 = arith.mulf %40, %41 : vector<10x16xf32>
    %43 = arith.addf %37, %42 : vector<10x16xf32>
    %c0_18 = arith.constant 0 : index
    %c2 = arith.constant 2 : index
    %44 = vector.load %arg5[%c0_18, %c2] : memref<3x18xf32, #tpu.memory_space<vmem>>, vector<3x16xf32>
    %c0_19 = arith.constant 0 : index
    %c2_20 = arith.constant 2 : index
    %45 = vector.load %arg2[%c0_19, %c2_20] : memref<10x9xf32, #tpu.memory_space<vmem>>, vector<10x1xf32>
    %46 = vector.extract_strided_slice %44 {offsets = [0, 0], sizes = [1, 16], strides = [1, 1]} : vector<3x16xf32> to vector<1x16xf32>
    %47 = vector.broadcast %45 : vector<10x1xf32> to vector<10x16xf32>
    %48 = vector.broadcast %46 : vector<1x16xf32> to vector<10x16xf32>
    %49 = arith.mulf %47, %48 : vector<10x16xf32>
    %50 = arith.addf %43, %49 : vector<10x16xf32>
    %c0_21 = arith.constant 0 : index
    %c5 = arith.constant 5 : index
    %51 = vector.load %arg2[%c0_21, %c5] : memref<10x9xf32, #tpu.memory_space<vmem>>, vector<10x1xf32>
    %52 = vector.extract_strided_slice %44 {offsets = [1, 0], sizes = [1, 16], strides = [1, 1]} : vector<3x16xf32> to vector<1x16xf32>
    %53 = vector.broadcast %51 : vector<10x1xf32> to vector<10x16xf32>
    %54 = vector.broadcast %52 : vector<1x16xf32> to vector<10x16xf32>
    %55 = arith.mulf %53, %54 : vector<10x16xf32>
    %56 = arith.addf %50, %55 : vector<10x16xf32>
    %c0_22 = arith.constant 0 : index
    %c8 = arith.constant 8 : index
    %57 = vector.load %arg2[%c0_22, %c8] : memref<10x9xf32, #tpu.memory_space<vmem>>, vector<10x1xf32>
    %58 = vector.extract_strided_slice %44 {offsets = [2, 0], sizes = [1, 16], strides = [1, 1]} : vector<3x16xf32> to vector<1x16xf32>
    %59 = vector.broadcast %57 : vector<10x1xf32> to vector<10x16xf32>
    %60 = vector.broadcast %58 : vector<1x16xf32> to vector<10x16xf32>
    %61 = arith.mulf %59, %60 : vector<10x16xf32>
    %62 = arith.addf %56, %61 : vector<10x16xf32>
    %c0_23 = arith.constant 0 : index
    %c0_24 = arith.constant 0 : index
    %63 = vector.load %arg3[%c0_23, %c0_24] : memref<10x1xf32, #tpu.memory_space<vmem>>, vector<10x1xf32>
    %64 = vector.broadcast %63 : vector<10x1xf32> to vector<10x16xf32>
    %65 = arith.addf %62, %64 : vector<10x16xf32>
    %c0_25 = arith.constant 0 : index
    %c0_26 = arith.constant 0 : index
    %c0_27 = arith.constant 0 : index
    %66 = vector.load %arg4[%c0_25, %c0_26, %c0_27] : memref<1x10x16xf32, #tpu.memory_space<vmem>>, vector<1x10x16xf32>
    %67 = vector.shape_cast %66 : vector<1x10x16xf32> to vector<10x16xf32>
    %68 = vector.shape_cast %65 : vector<10x16xf32> to vector<1x10x16xf32>
    tpu.vector_store %arg4[%c0_25, %c0_26, %c0_27], %68 {strides = array<i32>} : memref<1x10x16xf32, #tpu.memory_space<vmem>>, vector<1x10x16xf32>,
    return
  }
  func.func @transform_0(%arg0: i32) -> (i32, i32, i32) {
    %c0_i32 = arith.constant 0 : i32
    %c0_i32_0 = arith.constant 0 : i32
    %c0_i32_1 = arith.constant 0 : i32
    return %arg0, %c0_i32, %c0_i32_0 : i32, i32, i32
  }
  func.func @transform_1(%arg0: i32) -> (i32, i32) {
    %c0_i32 = arith.constant 0 : i32
    %c0_i32_0 = arith.constant 0 : i32
    %c0_i32_1 = arith.constant 0 : i32
    return %c0_i32, %c0_i32_0 : i32, i32
  }
  func.func @transform_2(%arg0: i32) -> (i32, i32) {
    %c0_i32 = arith.constant 0 : i32
    %c0_i32_0 = arith.constant 0 : i32
    %c0_i32_1 = arith.constant 0 : i32
    return %c0_i32, %c0_i32_0 : i32, i32
  }
  func.func @transform_3(%arg0: i32) -> (i32, i32, i32) {
    %c0_i32 = arith.constant 0 : i32
    %c0_i32_0 = arith.constant 0 : i32
    %c0_i32_1 = arith.constant 0 : i32
    return %arg0, %c0_i32, %c0_i32_0 : i32, i32, i32
  }
}

</mosaic_0001>

<llo_original>
// kernel: tpu_custom_call.1
$region0: #{tpu_custom_call.1}
  #allocation0 [shape = 'u32[]', space=smem, size = 0x4, offset = 0x4, fixed_abs, tag = 'smem constant byte address 0x4 - core index']
  #allocation1 [shape = 'u32[144,128]{1,0:T(1,128)}', space=vmem, size = 0x12000, scoped, tag = 'internal scratch']
  #allocation2 [shape = 'f32[3,18]{1,0:T(4,128)}', space=vmem, size = 0x800, scoped, tag = 'scratch operand']
  %s0 = inlined_call_operand.vmem [shape: f32[2,3,16], index: 0, kind: input, shape index: {}]
  %s1 = inlined_call_operand.vmem [shape: f32[10,9], index: 1, kind: input, shape index: {}]
  %s2 = inlined_call_operand.vmem [shape: f32[10,1], index: 2, kind: input, shape index: {}]
  %s3 = inlined_call_operand.vmem [shape: f32[2,10,16], index: 3, kind: output, shape index: {}]
  %s4 = sld [smem:[#allocation0]]
  $region45: #{tpu_custom_call.1} parent=0
    _
  %s6 = ssub.s32 1, %s4
  %s7 = scalar_select 0, %s6, %s4
  loop: start=0, step=1, limit=4
  $region2: #{tpu_custom_call.1} parent=0 // loop_pre_header
    _
  $region3: #{tpu_custom_call.1} parent=0 // loop_header
    %s9 = sphi 0, %s13
    %p10 = scmp.ge.s32.totalorder %s9, 4
    %s19 = sphi 0, %s21
    %s22 = sphi 0, %s19
    %s23 = sphi 0, %s22
    %s39 = sphi 0, %s23
    %s43 = sphi 0, %s43
    %s45 = sphi 0, %s43
    %s46 = sphi 0, %s45
    %s60 = sphi 0, %s46
    %s64 = sphi 0, %s64
    %s66 = sphi 0, %s64
    %s67 = sphi 0, %s66
    %s81 = sphi 0, %s67
    %s87 = sphi 0, %s89
    %s90 = sphi 0, %s87
    %s91 = sphi 0, %s90
    %s107 = sphi 0, %s91
  $region4: #{tpu_custom_call.1} parent=0 // loop_header_branch
    %12 = sbr.rel (%p10) target = $region8
  $region5: #{tpu_custom_call.1} parent=0 // loop_body
    %s14 = ssub.s32 %s9, 1
    %s15 = ssub.s32 %s9, 2
    %s16 = sadd.s32 %s9, 1
    %s17 = ssub.s32 %s9, %s16
    %p18 = scmp.eq.s32.totalorder %s17, 0
    %s20 = sadd.s32 %s19, 1
    %s21 = scalar_select %p18, %s19, %s20
    %p24 = pneg %p18
    %p25 = scmp.eq.s32.totalorder %s9, 1
    %p26 = por %p24, %p25
    %p27 = scmp.ne.s32.totalorder %s19, %s22
    %p28 = scmp.eq.s32.totalorder %s9, 0
    %p29 = por %p27, %p28
    %p30 = scmp.ne.s32.totalorder %s19, %s22
    %p31 = scmp.eq.s32.totalorder %s14, 1
    %p32 = por %p30, %p31
    %p33 = scmp.ne.s32.totalorder %s22, %s23
    %p34 = scmp.eq.s32.totalorder %s14, 0
    %p35 = por %p33, %p34
    %p36 = scmp.ne.s32.totalorder %s22, %s23
    %p37 = scmp.eq.s32.totalorder %s15, 1
    %p38 = por %p36, %p37
    %p40 = scmp.ne.s32.totalorder %s23, %s39
    %p41 = scmp.eq.s32.totalorder %s15, 0
    %p42 = por %p40, %p41
    %s44 = sadd.s32 %s43, 1
    %p47 = scmp.eq.s32.totalorder %s9, 1
    %p48 = scmp.ne.s32.totalorder %s43, %s45
    %p49 = scmp.eq.s32.totalorder %s9, 0
    %p50 = por %p48, %p49
    %p51 = scmp.ne.s32.totalorder %s43, %s45
    %p52 = scmp.eq.s32.totalorder %s14, 1
    %p53 = por %p51, %p52
    %p54 = scmp.ne.s32.totalorder %s45, %s46
    %p55 = scmp.eq.s32.totalorder %s14, 0
    %p56 = por %p54, %p55
    %p57 = scmp.ne.s32.totalorder %s45, %s46
    %p58 = scmp.eq.s32.totalorder %s15, 1
    %p59 = por %p57, %p58
    %p61 = scmp.ne.s32.totalorder %s46, %s60
    %p62 = scmp.eq.s32.totalorder %s15, 0
    %p63 = por %p61, %p62
    %s65 = sadd.s32 %s64, 1
    %p68 = scmp.eq.s32.totalorder %s9, 1
    %p69 = scmp.ne.s32.totalorder %s64, %s66
    %p70 = scmp.eq.s32.totalorder %s9, 0
    %p71 = por %p69, %p70
    %p72 = scmp.ne.s32.totalorder %s64, %s66
    %p73 = scmp.eq.s32.totalorder %s14, 1
    %p74 = por %p72, %p73
    %p75 = scmp.ne.s32.totalorder %s66, %s67
    %p76 = scmp.eq.s32.totalorder %s14, 0
    %p77 = por %p75, %p76
    %p78 = scmp.ne.s32.totalorder %s66, %s67
    %p79 = scmp.eq.s32.totalorder %s15, 1
    %p80 = por %p78, %p79
    %p82 = scmp.ne.s32.totalorder %s67, %s81
    %p83 = scmp.eq.s32.totalorder %s15, 0
    %p84 = por %p82, %p83
    %s85 = ssub.s32 %s9, %s16
    %p86 = scmp.eq.s32.totalorder %s85, 0
    %s88 = sadd.s32 %s87, 1
    %s89 = scalar_select %p86, %s87, %s88
    %p92 = pneg %p86
    %p93 = scmp.eq.s32.totalorder %s9, 1
    %p94 = por %p92, %p93
    %p95 = scmp.ne.s32.totalorder %s87, %s90
    %p96 = scmp.eq.s32.totalorder %s9, 0
    %p97 = por %p95, %p96
    %p98 = scmp.ne.s32.totalorder %s87, %s90
    %p99 = scmp.eq.s32.totalorder %s14, 1
    %p100 = por %p98, %p99
    %p101 = scmp.ne.s32.totalorder %s90, %s91
    %p102 = scmp.eq.s32.totalorder %s14, 0
    %p103 = por %p101, %p102
    %p104 = scmp.ne.s32.totalorder %s90, %s91
    %p105 = scmp.eq.s32.totalorder %s15, 1
    %p106 = por %p104, %p105
    %p108 = scmp.ne.s32.totalorder %s91, %s107
    %p109 = scmp.eq.s32.totalorder %s15, 0
    %p110 = por %p108, %p109
    %p111 = scmp.le.s32.totalorder 1, %s9
    %p112 = scmp.lt.s32.totalorder %s9, 3
    %p113 = pnand %p111, %p112
    %p114 = pneg %p113
    // Predicated region
    $region9: #{tpu_custom_call.1} parent=5 // pred_check
      _
    $region10: #{tpu_custom_call.1} parent=5 // pred_check_branch
      %116 = sbr.rel (%p113) target = $region12
    $region11: #{tpu_custom_call.1} parent=5 // pred_region
      %s117 = ssub.s32 %s9, 1
      // Predicated region
      $region13: #{tpu_custom_call.1} parent=11 // pred_check
        %p118 = pneg %p56
      $region14: #{tpu_custom_call.1} parent=11 // pred_check_branch
        %120 = sbr.rel (%p118) target = $region16
      $region15: #{tpu_custom_call.1} parent=11 // pred_region
        _
      $region16: #{tpu_custom_call.1} parent=11 // pred_fallthru
        _
      // Predicated region
      $region17: #{tpu_custom_call.1} parent=11 // pred_check
        %p121 = pneg %p77
      $region18: #{tpu_custom_call.1} parent=11 // pred_check_branch
        %123 = sbr.rel (%p121) target = $region20
      $region19: #{tpu_custom_call.1} parent=11 // pred_region
        _
      $region20: #{tpu_custom_call.1} parent=11 // pred_fallthru
        _
    $region12: #{tpu_custom_call.1} parent=5 // pred_fallthru
      _
    %p124 = scmp.lt.s32.totalorder %s9, 2
    // Predicated region
    $region21: #{tpu_custom_call.1} parent=5 // pred_check
      %p125 = pneg %p124
    $region22: #{tpu_custom_call.1} parent=5 // pred_check_branch
      %127 = sbr.rel (%p125) target = $region24
    $region23: #{tpu_custom_call.1} parent=5 // pred_region
      // Predicated region
      $region25: #{tpu_custom_call.1} parent=23 // pred_check
        %p128 = pneg %p29
      $region26: #{tpu_custom_call.1} parent=23 // pred_check_branch
        %130 = sbr.rel (%p128) target = $region28
      $region27: #{tpu_custom_call.1} parent=23 // pred_region
        %p131 = scmp.lt.s32.totalorder %s9, 1
        %s132 = scalar_select %p131, %s9, 1
        %s133 = smul.addr %s132, 4
        %s134 = scalar_lea.vmem %s0, %s133
      $region28: #{tpu_custom_call.1} parent=23 // pred_fallthru
        _
    $region24: #{tpu_custom_call.1} parent=5 // pred_fallthru
      _
    %p135 = scmp.le.s32.totalorder 1, %s9
    %p136 = scmp.lt.s32.totalorder %s9, 3
    %p137 = pnand %p135, %p136
    %p138 = pneg %p137
    // Predicated region
    $region29: #{tpu_custom_call.1} parent=5 // pred_check
      _
    $region30: #{tpu_custom_call.1} parent=5 // pred_check_branch
      %140 = sbr.rel (%p137) target = $region32
    $region31: #{tpu_custom_call.1} parent=5 // pred_region
      %s141 = ssub.s32 %s9, 1
      %p142 = scmp.lt.s32.totalorder %s14, 1
      %s143 = scalar_select %p142, %s14, 1
      %s144 = smul.addr %s143, 4
      %s145 = scalar_lea.vmem %s0, %s144
      %p146 = pneg %p35
      %p147 = pneg %p32
      %p148 = pneg %p56
      %p149 = pneg %p53
      %p150 = pneg %p77
      %p151 = pneg %p74
      %p152 = pneg %p103
      %p153 = pneg %p100
      %p154 = scmp.lt.s32.totalorder %s14, 1
      %s155 = scalar_select %p154, %s14, 1
      %s156 = smul.addr %s155, 2
      %s157 = smul.addr %s156, 8
      %s158 = scalar_lea.vmem %s3, %s157
      %p159 = scmp.lt.s32.totalorder %s14, 1
      %s160 = scalar_select %p159, %s14, 1
      %s161 = smul.addr %s160, 4
      %s162 = scalar_lea.vmem %s0, %s161
      %p163 = scmp.lt.s32.totalorder %s14, 1
      %s164 = scalar_select %p163, %s14, 1
      %s165 = smul.addr %s164, 2
      %s166 = smul.addr %s165, 8
      %s167 = scalar_lea.vmem %s3, %s166
      %vm168 = vcmask 141312
      %169 = vst.msk [vmem:[#allocation2] sm:$0x7] %vm168, 0.0
      %v170 = vld [vmem:[%s162] sm:$0x7]
      %172 = vrot.lane.b32.xlu0 %v170, 1
      %v173 = vpop.permute.xlu0 %172
      %vm175 = vcmask 133128
      %176 = vst.msk [vmem:[#allocation2] sm:$0x7] %vm175, %v173
      %v177 = vld [vmem:[#allocation2] sm:$0x7]
      %v178 = vld [vmem:[%s1] sm:$0xff]
      %v179 = vld [vmem:[%s1 + $0x8] sm:$0x3]
      %181 = vset.pattern.permute.xlu0 0
      %182 = vperm.xlu0 %181, %v178
      %v183 = vpop.permute.xlu0 %182
      %186 = vset.pattern.permute.xlu0 0
      %187 = vperm.xlu0 %186, %v179
      %v188 = vpop.permute.xlu0 %187
      %v190 = vlaneseq
      %v191 = vshrl.u32 %v190, 7
      %v192 = vsub.s32 0, %v191
      %v193 = vrot.slane %v177, %v192
      %v194 = vmul.f32 %v183, %v193
      %v195 = vmul.f32 %v188, %v193
      %v196 = vadd.f32 %v194, 0.0
      %v197 = vadd.f32 %v195, 0.0
      %198 = vset.pattern.permute.xlu0 3
      %199 = vperm.xlu0 %198, %v178
      %v200 = vpop.permute.xlu0 %199
      %202 = vset.pattern.permute.xlu0 3
      %203 = vperm.xlu0 %202, %v179
      %v204 = vpop.permute.xlu0 %203
      %v206 = vlaneseq
      %v207 = vshrl.u32 %v206, 7
      %v208 = vsub.s32 1, %v207
      %v209 = vrot.slane %v177, %v208
      %v210 = vmul.f32 %v200, %v209
      %v211 = vmul.f32 %v204, %v209
      %v212 = vadd.f32 %v196, %v210
      %v213 = vadd.f32 %v197, %v211
      %214 = vset.pattern.permute.xlu0 6
      %215 = vperm.xlu0 %214, %v178
      %v216 = vpop.permute.xlu0 %215
      %218 = vset.pattern.permute.xlu0 6
      %219 = vperm.xlu0 %218, %v179
      %v220 = vpop.permute.xlu0 %219
      %v222 = vlaneseq
      %v223 = vshrl.u32 %v222, 7
      %v224 = vsub.s32 2, %v223
      %v225 = vrot.slane %v177, %v224
      %v226 = vmul.f32 %v216, %v225
      %v227 = vmul.f32 %v220, %v225
      %v228 = vadd.f32 %v212, %v226
      %v229 = vadd.f32 %v213, %v227
      %230 = vset.pattern.permute.xlu0 1
      %231 = vperm.xlu0 %230, %v178
      %v232 = vpop.permute.xlu0 %231
      %234 = vset.pattern.permute.xlu0 1
      %235 = vperm.xlu0 %234, %v179
      %v236 = vpop.permute.xlu0 %235
      %v238 = vmul.f32 %v232, %v193
      %v239 = vmul.f32 %v236, %v193
      %242 = vrot.lane.b32.xlu0 %v238, 127
      %v243 = vpop.permute.xlu0 %242
      %244 = vrot.lane.b32.xlu0 %v239, 127
      %v245 = vpop.permute.xlu0 %244
      %v248 = vadd.f32 %v228, %v243
      %v249 = vadd.f32 %v229, %v245
      %250 = vset.pattern.permute.xlu0 4
      %251 = vperm.xlu0 %250, %v178
      %v252 = vpop.permute.xlu0 %251
      %254 = vset.pattern.permute.xlu0 4
      %255 = vperm.xlu0 %254, %v179
      %v256 = vpop.permute.xlu0 %255
      %v258 = vmul.f32 %v252, %v209
      %v259 = vmul.f32 %v256, %v209
      %262 = vrot.lane.b32.xlu0 %v258, 127
      %v263 = vpop.permute.xlu0 %262
      %264 = vrot.lane.b32.xlu0 %v259, 127
      %v265 = vpop.permute.xlu0 %264
      %v268 = vadd.f32 %v248, %v263
      %v269 = vadd.f32 %v249, %v265
      %270 = vset.pattern.permute.xlu0 7
      %271 = vperm.xlu0 %270, %v178
      %v272 = vpop.permute.xlu0 %271
      %274 = vset.pattern.permute.xlu0 7
      %275 = vperm.xlu0 %274, %v179
      %v276 = vpop.permute.xlu0 %275
      %v278 = vmul.f32 %v272, %v225
      %v279 = vmul.f32 %v276, %v225
      %282 = vrot.lane.b32.xlu0 %v278, 127
      %v283 = vpop.permute.xlu0 %282
      %284 = vrot.lane.b32.xlu0 %v279, 127
      %v285 = vpop.permute.xlu0 %284
      %v288 = vadd.f32 %v268, %v283
      %v289 = vadd.f32 %v269, %v285
      %290 = vset.pattern.permute.xlu0 2
      %291 = vperm.xlu0 %290, %v178
      %v292 = vpop.permute.xlu0 %291
      %294 = vset.pattern.permute.xlu0 2
      %295 = vperm.xlu0 %294, %v179
      %v296 = vpop.permute.xlu0 %295
      %v298 = vmul.f32 %v292, %v193
      %v299 = vmul.f32 %v296, %v193
      %302 = vrot.lane.b32.xlu0 %v298, 126
      %v303 = vpop.permute.xlu0 %302
      %304 = vrot.lane.b32.xlu0 %v299, 126
      %v305 = vpop.permute.xlu0 %304
      %v308 = vadd.f32 %v288, %v303
      %v309 = vadd.f32 %v289, %v305
      %310 = vset.pattern.permute.xlu0 5
      %311 = vperm.xlu0 %310, %v178
      %v312 = vpop.permute.xlu0 %311
      %314 = vset.pattern.permute.xlu0 5
      %315 = vperm.xlu0 %314, %v179
      %v316 = vpop.permute.xlu0 %315
      %v318 = vmul.f32 %v312, %v209
      %v319 = vmul.f32 %v316, %v209
      %322 = vrot.lane.b32.xlu0 %v318, 126
      %v323 = vpop.permute.xlu0 %322
      %324 = vrot.lane.b32.xlu0 %v319, 126
      %v325 = vpop.permute.xlu0 %324
      %v328 = vadd.f32 %v308, %v323
      %v329 = vadd.f32 %v309, %v325
      %330 = vset.pattern.permute.xlu0 8
      %331 = vperm.xlu0 %330, %v178
      %v332 = vpop.permute.xlu0 %331
      %334 = vset.pattern.permute.xlu0 8
      %335 = vperm.xlu0 %334, %v179
      %v336 = vpop.permute.xlu0 %335
      %v338 = vmul.f32 %v332, %v225
      %v339 = vmul.f32 %v336, %v225
      %342 = vrot.lane.b32.xlu0 %v338, 126
      %v343 = vpop.permute.xlu0 %342
      %344 = vrot.lane.b32.xlu0 %v339, 126
      %v345 = vpop.permute.xlu0 %344
      %v348 = vadd.f32 %v328, %v343
      %v349 = vadd.f32 %v329, %v345
      %v350 = vld [vmem:[%s2] sm:$0xff]
      %v351 = vld [vmem:[%s2 + $0x8] sm:$0x3]
      %353 = vset.pattern.permute.xlu0 0
      %354 = vperm.xlu0 %353, %v350
      %v355 = vpop.permute.xlu0 %354
      %358 = vset.pattern.permute.xlu0 0
      %359 = vperm.xlu0 %358, %v351
      %v360 = vpop.permute.xlu0 %359
      %v362 = vadd.f32 %v348, %v355
      %v363 = vadd.f32 %v349, %v360
      %vm364 = vcmask 130048
      %365 = vst.msk [vmem:[%s167] sm:$0xff] %vm364, %v362
      %vm366 = vcmask 123904
      %367 = vst.msk [vmem:[%s167 + $0x8] sm:$0x3] %vm366, %v363
      %p368 = scmp.lt.s32.totalorder %s14, 1
      %s369 = scalar_select %p368, %s14, 1
      %s370 = smul.addr %s369, 2
      %s371 = smul.addr %s370, 8
      %s372 = scalar_lea.vmem %s3, %s371
      // Predicated region
      $region33: #{tpu_custom_call.1} parent=31 // pred_check
        %p373 = pneg %p100
      $region34: #{tpu_custom_call.1} parent=31 // pred_check_branch
        %375 = sbr.rel (%p373) target = $region36
      $region35: #{tpu_custom_call.1} parent=31 // pred_region
        _
      $region36: #{tpu_custom_call.1} parent=31 // pred_fallthru
        _
    $region32: #{tpu_custom_call.1} parent=5 // pred_fallthru
      _
    %p376 = scmp.le.s32.totalorder 2, %s9
    // Predicated region
    $region37: #{tpu_custom_call.1} parent=5 // pred_check
      %p377 = pneg %p376
    $region38: #{tpu_custom_call.1} parent=5 // pred_check_branch
      %379 = sbr.rel (%p377) target = $region40
    $region39: #{tpu_custom_call.1} parent=5 // pred_region
      %s380 = ssub.s32 %s9, 2
      // Predicated region
      $region41: #{tpu_custom_call.1} parent=39 // pred_check
        %p381 = pneg %p106
      $region42: #{tpu_custom_call.1} parent=39 // pred_check_branch
        %383 = sbr.rel (%p381) target = $region44
      $region43: #{tpu_custom_call.1} parent=39 // pred_region
        %p384 = scmp.lt.s32.totalorder %s15, 1
        %s385 = scalar_select %p384, %s15, 1
        %s386 = smul.addr %s385, 2
        %s387 = smul.addr %s386, 8
        %s388 = scalar_lea.vmem %s3, %s387
      $region44: #{tpu_custom_call.1} parent=39 // pred_fallthru
        _
    $region40: #{tpu_custom_call.1} parent=5 // pred_fallthru
      _
  $region6: #{tpu_custom_call.1} parent=0 // loop_footer
    %s13 = sadd.s32 1, %s9
  $region7: #{tpu_custom_call.1} parent=0 // loop_footer_branch
    %8 = sbr.rel target = $region3
  $region8: #{tpu_custom_call.1} parent=0 // loop_exit
    _

</llo_original>
